<compile_context>
chip_gen: v6e
topology: v6e:2x2x1
jax: 0.10.0
libtpu: 0.0.40
codegen_flags: <defaults>
</compile_context>

<pallas_src>
import math

import jax
import jax.numpy as jnp
from jax.experimental import pallas as pl
from jax.experimental.pallas import tpu as pltpu


def _round_up(x, m):
    return ((x + m - 1) // m) * m


# ---------------------------------------------------------------------------
# Kernels
# ---------------------------------------------------------------------------

def _smooth_kernel_3d(x_ref, o_ref):
    # Layout (TN, H, W) with W a multiple of 128 (already lane-dense).
    x = x_ref[...].astype(jnp.float32)
    TN, H, W = x.shape

    # ---- horizontal pass: [1, 2, 1] with replication at the W edges --------
    lane = jax.lax.broadcasted_iota(jnp.int32, (TN, H, W), 2)
    xl = jnp.where(lane == 0, x, pltpu.roll(x, shift=1, axis=2))          # x[j-1]
    xr = jnp.where(lane == W - 1, x, pltpu.roll(x, shift=W - 1, axis=2))  # x[j+1]
    h = xl + 2.0 * x + xr

    # ---- vertical pass: [1, 2, 1] with replication at the H edges ----------
    sub = jax.lax.broadcasted_iota(jnp.int32, (TN, H, W), 1)
    hu = jnp.where(sub == 0, h, pltpu.roll(h, shift=1, axis=1))
    hd = jnp.where(sub == H - 1, h, pltpu.roll(h, shift=H - 1, axis=1))
    y = (hu + 2.0 * h + hd) * (1.0 / 16.0)

    o_ref[...] = y.astype(o_ref.dtype)


def _make_flat_kernel(H, W):
    L = H * W

    def _smooth_kernel_flat(x_ref, o_ref):
        # Layout (1, TN, L): each image flattened onto the lane axis, so even
        # tiny images (W=16) fill full 128-lane vregs and stores are unmasked.
        x = x_ref[...].astype(jnp.float32)
        shape = x.shape  # (1, TN, L)

        lane = jax.lax.broadcasted_iota(jnp.int32, shape, 2)
        col = lane % W  # cheap AND when W is a power of two

        # ---- horizontal [1, 2, 1] with replication at the W edges ----------
        xl = jnp.where(col == 0, x, pltpu.roll(x, shift=1, axis=2))         # x[j-1]
        xr = jnp.where(col == W - 1, x, pltpu.roll(x, shift=L - 1, axis=2))  # x[j+1]
        h = xl + 2.0 * x + xr

        # ---- vertical [1, 2, 1]: neighbours sit +-W lanes away --------------
        hu = jnp.where(lane < W, h, pltpu.roll(h, shift=W, axis=2))          # row above
        hd = jnp.where(lane >= L - W, h, pltpu.roll(h, shift=L - W, axis=2))  # row below
        y = (hu + 2.0 * h + hd) * (1.0 / 16.0)

        o_ref[...] = y.astype(o_ref.dtype)

    return _smooth_kernel_flat


# ---------------------------------------------------------------------------
# Host wrapper
# ---------------------------------------------------------------------------

def smooth_pallas(x):
    """x: [B, C, H, W]. Returns the replication-padded 3x3 binomial blur."""
    B, C, H, W = x.shape
    N = B * C
    L = H * W
    itemsize = jnp.dtype(x.dtype).itemsize

    lane_dense_3d = (W % 128 == 0)

    # --- VMEM footprint of one grid step: (8,128)-padded tiles, in+out
    #     double-buffered, plus ~4 full-block f32 intermediates. ------------
    def _block_footprint(tn):
        if lane_dense_3d:
            elems = tn * _round_up(H, 8) * _round_up(W, 128)
        else:
            elems = _round_up(tn, 8) * _round_up(L, 128)
        io = 2 * 2 * elems * itemsize       # input + output, double-buffered
        temps = 4 * elems * 4               # f32 temporaries (x, rolls, h, ...)
        return io + temps

    try:
        vmem_cap = pltpu.get_tpu_info().vmem_capacity_bytes
    except Exception:  # pragma: no cover - conservative fallback (v7x-sized)
        vmem_cap = 64 * 1024 * 1024
    budget = vmem_cap // 4

    # --- largest divisor of N that fits the budget, while keeping >= 2 grid
    #     steps (megacore sharding + pipeline overlap).  Exact divisor => no
    #     host-side pad / slice, no extra HBM passes. ------------------------
    divisors = sorted({d for i in range(1, int(math.isqrt(N)) + 1) if N % i == 0
                       for d in (i, N // i)})
    TN = 1
    for d in divisors:
        if _block_footprint(d) <= budget and (N == 1 or N // d >= 2):
            TN = d
    n_blocks = N // TN
    # TODO(synk): for a single huge image (N == 1, footprint > budget) an
    # H-tiled path with a 1-row halo would bound the working set; not needed
    # for the image sizes this module is used with.

    vmem_limit = int(min(max(int(1.5 * _block_footprint(TN)), 32 * 1024 * 1024),
                         int(0.9 * vmem_cap)))

    cost = pl.CostEstimate(flops=10 * N * H * W, transcendentals=0,
                           bytes_accessed=2 * N * H * W * itemsize)
    cparams = pltpu.CompilerParams(dimension_semantics=("parallel",),
                                   vmem_limit_bytes=vmem_limit)

    if lane_dense_3d:
        x_in = x.reshape(N, H, W)
        out = pl.pallas_call(
            _smooth_kernel_3d,
            out_shape=jax.ShapeDtypeStruct((N, H, W), x.dtype),
            grid_spec=pltpu.PrefetchScalarGridSpec(
                num_scalar_prefetch=0,
                grid=(n_blocks,),
                in_specs=[pl.BlockSpec((TN, H, W), lambda n: (n, 0, 0))],
                out_specs=pl.BlockSpec((TN, H, W), lambda n: (n, 0, 0)),
            ),
            compiler_params=cparams,
            cost_estimate=cost,
        )(x_in)
    else:
        # Lane-dense layout: contiguous (hence free) reshape to (n_blocks, TN, L).
        x_in = x.reshape(n_blocks, TN, L)
        out = pl.pallas_call(
            _make_flat_kernel(H, W),
            out_shape=jax.ShapeDtypeStruct((n_blocks, TN, L), x.dtype),
            grid_spec=pltpu.PrefetchScalarGridSpec(
                num_scalar_prefetch=0,
                grid=(n_blocks,),
                in_specs=[pl.BlockSpec((1, TN, L), lambda n: (n, 0, 0))],
                out_specs=pl.BlockSpec((1, TN, L), lambda n: (n, 0, 0)),
            ),
            compiler_params=cparams,
            cost_estimate=cost,
        )(x_in)

    return out.reshape(B, C, H, W)


# ---------------------------------------------------------------------------
# Pure-JAX reference (mirrors the PyTorch module exactly)
# ---------------------------------------------------------------------------

def smooth_reference(x):
    B, C, H, W = x.shape
    k = jnp.array([[1.0, 2.0, 1.0],
                   [2.0, 4.0, 2.0],
                   [1.0, 2.0, 1.0]], dtype=jnp.float32)
    k = k / k.sum()
    xp = jnp.pad(x, ((0, 0), (0, 0), (1, 1), (1, 1)), mode="edge")
    xr = xp.reshape(B * C, 1, H + 2, W + 2).astype(jnp.float32)
    y = jax.lax.conv_general_dilated(
        xr, k.reshape(1, 1, 3, 3),
        window_strides=(1, 1), padding="VALID",
        dimension_numbers=("NCHW", "OIHW", "NCHW"))
    return y.reshape(B, C, H, W).astype(x.dtype)


if __name__ == "__main__":
    # Small shapes consistent with the module: x [B=2, C=4, H=16, W=16]
    B, C, H, W = 2, 4, 16, 16

    key = jax.random.PRNGKey(0)
    x = jax.random.normal(key, (B, C, H, W), dtype=jnp.float32)

    out = smooth_pallas(x)
    out = jax.block_until_ready(out)

    ref = smooth_reference(x)
    assert out.shape == (B, C, H, W)
    assert jnp.allclose(out, ref, atol=1e-5, rtol=1e-5), "mismatch vs reference"

    print("KERNEL_OK")
</pallas_src>

<mosaic_0001>
module attributes {stable_mosaic.version = 11 : i64} {
  func.func @_smooth_kernel_flat(%arg0: i32, %arg1: memref<1x4x256xf32, #tpu.memory_space<vmem>>, %arg2: memref<1x4x256xf32, #tpu.memory_space<vmem>>) attributes {dimension_semantics = [#tpu.dimension_semantics<parallel>], iteration_bounds = array<i64: 2>, scalar_prefetch = 0 : i64, scratch_operands = 0 : i64, tpu.core_type = #tpu.core_type<tc>, window_params = [{transform_indices = @transform_0, window_bounds = array<i64: 1, 4, 256>}, {transform_indices = @transform_1, window_bounds = array<i64: 1, 4, 256>}]} {
    %c0 = arith.constant 0 : index
    %c0_0 = arith.constant 0 : index
    %c0_1 = arith.constant 0 : index
    %0 = vector.load %arg1[%c0, %c0_0, %c0_1] : memref<1x4x256xf32, #tpu.memory_space<vmem>>, vector<1x4x256xf32>
    %1 = tpu.iota {dimensions = array<i32: 2>} : vector<1x4x256xi32>
    %c16_i32 = arith.constant 16 : i32
    %c0_i32 = arith.constant 0 : i32
    %2 = arith.cmpi eq, %c16_i32, %c0_i32 : i32
    %c1_i32 = arith.constant 1 : i32
    %3 = arith.select %2, %c1_i32, %c16_i32 : i32
    %4 = vector.broadcast %3 : i32 to vector<1x4x256xi32>
    %5 = arith.remsi %1, %4 : vector<1x4x256xi32>
    %c0_i32_2 = arith.constant 0 : i32
    %6 = vector.broadcast %c0_i32_2 : i32 to vector<1x4x256xi32>
    %7 = arith.cmpi ne, %5, %6 : vector<1x4x256xi32>
    %c0_i32_3 = arith.constant 0 : i32
    %8 = vector.broadcast %c0_i32_3 : i32 to vector<1x4x256xi32>
    %9 = arith.cmpi slt, %5, %8 : vector<1x4x256xi32>
    %c0_i32_4 = arith.constant 0 : i32
    %10 = arith.cmpi slt, %3, %c0_i32_4 : i32
    %11 = vector.broadcast %10 : i1 to vector<1x4x256xi1>
    %12 = vector.broadcast %11 : vector<1x4x256xi1> to vector<1x4x256xi1>
    %13 = arith.xori %9, %12 : vector<1x4x256xi1>
    %14 = arith.andi %13, %7 : vector<1x4x256xi1>
    %15 = vector.broadcast %3 : i32 to vector<1x4x256xi32>
    %16 = arith.addi %5, %15 : vector<1x4x256xi32>
    %17 = arith.select %14, %16, %5 : vector<1x4x256xi1>, vector<1x4x256xi32>
    %c0_i32_5 = arith.constant 0 : i32
    %18 = vector.broadcast %c0_i32_5 : i32 to vector<1x4x256xi32>
    %19 = arith.cmpi eq, %17, %18 : vector<1x4x256xi32>
    %c1_i32_6 = arith.constant 1 : i32
    %20 = tpu.dynamic_rotate %0 by %c1_i32_6 dim 2 : vector<1x4x256xf32>, i32 -> vector<1x4x256xf32>
    %21 = arith.select %19, %0, %20 : vector<1x4x256xi1>, vector<1x4x256xf32>
    %c15_i32 = arith.constant 15 : i32
    %22 = vector.broadcast %c15_i32 : i32 to vector<1x4x256xi32>
    %23 = arith.cmpi eq, %17, %22 : vector<1x4x256xi32>
    %c255_i32 = arith.constant 255 : i32
    %24 = tpu.dynamic_rotate %0 by %c255_i32 dim 2 : vector<1x4x256xf32>, i32 -> vector<1x4x256xf32>
    %25 = arith.select %23, %0, %24 : vector<1x4x256xi1>, vector<1x4x256xf32>
    %cst = arith.constant 2.000000e+00 : f32
    %26 = vector.broadcast %cst : f32 to vector<1x4x256xf32>
    %27 = arith.mulf %26, %0 : vector<1x4x256xf32>
    %28 = arith.addf %21, %27 : vector<1x4x256xf32>
    %29 = arith.addf %28, %25 : vector<1x4x256xf32>
    %c16_i32_7 = arith.constant 16 : i32
    %30 = vector.broadcast %c16_i32_7 : i32 to vector<1x4x256xi32>
    %31 = arith.cmpi slt, %1, %30 : vector<1x4x256xi32>
    %c16_i32_8 = arith.constant 16 : i32
    %32 = tpu.dynamic_rotate %29 by %c16_i32_8 dim 2 : vector<1x4x256xf32>, i32 -> vector<1x4x256xf32>
    %33 = arith.select %31, %29, %32 : vector<1x4x256xi1>, vector<1x4x256xf32>
    %c240_i32 = arith.constant 240 : i32
    %34 = vector.broadcast %c240_i32 : i32 to vector<1x4x256xi32>
    %35 = arith.cmpi sge, %1, %34 : vector<1x4x256xi32>
    %c240_i32_9 = arith.constant 240 : i32
    %36 = tpu.dynamic_rotate %29 by %c240_i32_9 dim 2 : vector<1x4x256xf32>, i32 -> vector<1x4x256xf32>
    %37 = arith.select %35, %29, %36 : vector<1x4x256xi1>, vector<1x4x256xf32>
    %cst_10 = arith.constant 2.000000e+00 : f32
    %38 = vector.broadcast %cst_10 : f32 to vector<1x4x256xf32>
    %39 = arith.mulf %38, %29 : vector<1x4x256xf32>
    %40 = arith.addf %33, %39 : vector<1x4x256xf32>
    %41 = arith.addf %40, %37 : vector<1x4x256xf32>
    %cst_11 = arith.constant 6.250000e-02 : f32
    %42 = vector.broadcast %cst_11 : f32 to vector<1x4x256xf32>
    %43 = arith.mulf %41, %42 : vector<1x4x256xf32>
    %c0_12 = arith.constant 0 : index
    %c0_13 = arith.constant 0 : index
    %c0_14 = arith.constant 0 : index
    %44 = vector.load %arg2[%c0_12, %c0_13, %c0_14] : memref<1x4x256xf32, #tpu.memory_space<vmem>>, vector<1x4x256xf32>
    tpu.vector_store %arg2[%c0_12, %c0_13, %c0_14], %43 {strides = array<i32>} : memref<1x4x256xf32, #tpu.memory_space<vmem>>, vector<1x4x256xf32>,
    return
  }
  func.func @transform_0(%arg0: i32) -> (i32, i32, i32) {
    %c0_i32 = arith.constant 0 : i32
    %c0_i32_0 = arith.constant 0 : i32
    %c0_i32_1 = arith.constant 0 : i32
    return %arg0, %c0_i32, %c0_i32_0 : i32, i32, i32
  }
  func.func @transform_1(%arg0: i32) -> (i32, i32, i32) {
    %c0_i32 = arith.constant 0 : i32
    %c0_i32_0 = arith.constant 0 : i32
    %c0_i32_1 = arith.constant 0 : i32
    return %arg0, %c0_i32, %c0_i32_0 : i32, i32, i32
  }
}

</mosaic_0001>

<llo_original>
// kernel: tpu_custom_call.1
$region0: #{tpu_custom_call.1}
  #allocation0 [shape = 'u32[]', space=smem, size = 0x4, offset = 0x4, fixed_abs, tag = 'smem constant byte address 0x4 - core index']
  #allocation1 [shape = 'u32[144,128]{1,0:T(1,128)}', space=vmem, size = 0x12000, scoped, tag = 'internal scratch']
  %s0 = inlined_call_operand.hbm [shape: f32[2,4,256], index: 0, kind: input, shape index: {}]
  %s1 = inlined_call_operand.hbm [shape: f32[2,4,256], index: 1, kind: output, shape index: {}]
  %s2 = sld [smem:[#allocation0]]
  $region41: #{tpu_custom_call.1} parent=0
    _
  %s4 = ssub.s32 1, %s2
  %s5 = scalar_select 0, %s4, %s2
  $region1: #{tpu_custom_call.1} parent=0
    #allocation2 [shape = 'u8[8192]{0}', space=vmem, size = 0x2000, scoped, tag = 'input window, operand 0']
    #allocation3 [shape = 's32[2]{0}', space=sflag, size = 0x8, scoped, tag = 'scoped memory for tpu_custom_call.1']
    #allocation4 [shape = 's32[2]{0}', space=sflag, size = 0x8, scoped, tag = 'scoped memory for tpu_custom_call.1']
    #allocation5 [shape = 'u8[8192]{0}', space=vmem, size = 0x2000, scoped, tag = 'output window, operand 0']
    %6 = vsyncpa [#allocation3], 0
    %s7 = scalar_lea.sflag [#allocation3], 1
    %8 = vsyncpa %s7, 0
    %9 = vsyncpa [#allocation4], 0
    %s10 = scalar_lea.sflag [#allocation4], 1
    %11 = vsyncpa %s10, 0
    loop: start=0, step=1, limit=4
    $region2: #{tpu_custom_call.1} parent=1 // loop_pre_header
      _
    $region3: #{tpu_custom_call.1} parent=1 // loop_header
      %s13 = sphi 0, %s17
      %p14 = scmp.ge.s32.totalorder %s13, 4
      %s23 = sphi 0, %s25
      %s26 = sphi 0, %s23
      %s27 = sphi 0, %s26
      %s43 = sphi 0, %s27
      %s49 = sphi 0, %s51
      %s52 = sphi 0, %s49
      %s53 = sphi 0, %s52
      %s69 = sphi 0, %s53
    $region4: #{tpu_custom_call.1} parent=1 // loop_header_branch
      %16 = sbr.rel (%p14) target = $region8
    $region5: #{tpu_custom_call.1} parent=1 // loop_body
      %s18 = ssub.s32 %s13, 1
      %s19 = ssub.s32 %s13, 2
      %s20 = sadd.s32 %s13, 1
      %s21 = ssub.s32 %s13, %s20
      %p22 = scmp.eq.s32.totalorder %s21, 0
      %s24 = sadd.s32 %s23, 1
      %s25 = scalar_select %p22, %s23, %s24
      %p28 = pneg %p22
      %p29 = scmp.eq.s32.totalorder %s13, 1
      %p30 = por %p28, %p29
      %p31 = scmp.ne.s32.totalorder %s23, %s26
      %p32 = scmp.eq.s32.totalorder %s13, 0
      %p33 = por %p31, %p32
      %p34 = scmp.ne.s32.totalorder %s23, %s26
      %p35 = scmp.eq.s32.totalorder %s18, 1
      %p36 = por %p34, %p35
      %p37 = scmp.ne.s32.totalorder %s26, %s27
      %p38 = scmp.eq.s32.totalorder %s18, 0
      %p39 = por %p37, %p38
      %p40 = scmp.ne.s32.totalorder %s26, %s27
      %p41 = scmp.eq.s32.totalorder %s19, 1
      %p42 = por %p40, %p41
      %p44 = scmp.ne.s32.totalorder %s27, %s43
      %p45 = scmp.eq.s32.totalorder %s19, 0
      %p46 = por %p44, %p45
      %s47 = ssub.s32 %s13, %s20
      %p48 = scmp.eq.s32.totalorder %s47, 0
      %s50 = sadd.s32 %s49, 1
      %s51 = scalar_select %p48, %s49, %s50
      %p54 = pneg %p48
      %p55 = scmp.eq.s32.totalorder %s13, 1
      %p56 = por %p54, %p55
      %p57 = scmp.ne.s32.totalorder %s49, %s52
      %p58 = scmp.eq.s32.totalorder %s13, 0
      %p59 = por %p57, %p58
      %p60 = scmp.ne.s32.totalorder %s49, %s52
      %p61 = scmp.eq.s32.totalorder %s18, 1
      %p62 = por %p60, %p61
      %p63 = scmp.ne.s32.totalorder %s52, %s53
      %p64 = scmp.eq.s32.totalorder %s18, 0
      %p65 = por %p63, %p64
      %p66 = scmp.ne.s32.totalorder %s52, %s53
      %p67 = scmp.eq.s32.totalorder %s19, 1
      %p68 = por %p66, %p67
      %p70 = scmp.ne.s32.totalorder %s53, %s69
      %p71 = scmp.eq.s32.totalorder %s19, 0
      %p72 = por %p70, %p71
      %p73 = scmp.le.s32.totalorder 1, %s13
      %p74 = scmp.lt.s32.totalorder %s13, 3
      %p75 = pnand %p73, %p74
      %p76 = pneg %p75
      // Predicated region
      $region9: #{tpu_custom_call.1} parent=5 // pred_check
        _
      $region10: #{tpu_custom_call.1} parent=5 // pred_check_branch
        %78 = sbr.rel (%p75) target = $region12
      $region11: #{tpu_custom_call.1} parent=5 // pred_region
        %s79 = ssub.s32 %s13, 1
      $region12: #{tpu_custom_call.1} parent=5 // pred_fallthru
        _
      %p80 = scmp.lt.s32.totalorder %s13, 2
      // Predicated region
      $region13: #{tpu_custom_call.1} parent=5 // pred_check
        %p81 = pneg %p80
      $region14: #{tpu_custom_call.1} parent=5 // pred_check_branch
        %83 = sbr.rel (%p81) target = $region16
      $region15: #{tpu_custom_call.1} parent=5 // pred_region
        // Predicated region
        $region17: #{tpu_custom_call.1} parent=15 // pred_check
          %p84 = pneg %p33
        $region18: #{tpu_custom_call.1} parent=15 // pred_check_branch
          %86 = sbr.rel (%p84) target = $region20
        $region19: #{tpu_custom_call.1} parent=15 // pred_region
          %s87 = sand.u32 %s23, 1
          %s88 = scalar_lea.sflag [#allocation3], %s87
          %s89 = sand.u32 %s23, 1
          %s90 = smul.addr %s89, 8
          %s91 = scalar_lea.vmem [#allocation2], %s90
          %s93 = ssub.s32 128, 128
          %94 = vsyncadd %s88, %s93
          %s95 = smul.addr %s13, 2
          %s96 = smul.addr %s95, 64
          %s97 = scalar_lea.hbm %s0, %s96
          %s99 = sshll.u32 %s91, 4
          %s100 = int_to_ptr.vmem [resolvable:$true] %s99
          %102 = dma.hbm_to_vmem [thread:$0]  %s97, 128, %s100, %s88
        $region20: #{tpu_custom_call.1} parent=15 // pred_fallthru
          _
      $region16: #{tpu_custom_call.1} parent=5 // pred_fallthru
        _
      %p103 = scmp.le.s32.totalorder 1, %s13
      %p104 = scmp.lt.s32.totalorder %s13, 3
      %p105 = pnand %p103, %p104
      %p106 = pneg %p105
      // Predicated region
      $region21: #{tpu_custom_call.1} parent=5 // pred_check
        _
      $region22: #{tpu_custom_call.1} parent=5 // pred_check_branch
        %108 = sbr.rel (%p105) target = $region24
      $region23: #{tpu_custom_call.1} parent=5 // pred_region
        %s109 = ssub.s32 %s13, 1
        %s110 = sand.u32 %s26, 1
        %s111 = scalar_lea.sflag [#allocation3], %s110
        %s112 = sand.u32 %s26, 1
        %s113 = smul.addr %s112, 8
        %s114 = scalar_lea.vmem [#allocation2], %s113
        // Predicated region
        $region25: #{tpu_custom_call.1} parent=23 // pred_check
          %p115 = pneg %p39
        $region26: #{tpu_custom_call.1} parent=23 // pred_check_branch
          %117 = sbr.rel (%p115) target = $region28
        $region27: #{tpu_custom_call.1} parent=23 // pred_region
          %118 = dma.done %s111, 128
        $region28: #{tpu_custom_call.1} parent=23 // pred_fallthru
          _
        %s119 = sand.u32 %s26, 1
        %s120 = scalar_lea.sflag [#allocation3], %s119
        %s121 = sand.u32 %s26, 1
        %s122 = smul.addr %s121, 8
        %s123 = scalar_lea.vmem [#allocation2], %s122
        %p124 = pneg %p39
        %p125 = pneg %p36
        %p126 = pneg %p65
        %p127 = pneg %p62
        %s128 = sand.u32 %s52, 1
        %s129 = scalar_lea.sflag [#allocation4], %s128
        %s130 = sand.u32 %s52, 1
        %s131 = smul.addr %s130, 8
        %s132 = scalar_lea.vmem [#allocation5], %s131
        %v133 = vld [vmem:[%s114] sm:$0xff]
        %v134 = vlaneseq
        %v135 = vand.u32 %v134, 127
        %v136 = vadd.s32 %v135, 128
        %vm137 = vcmp.lt.s32.totalorder %v135, 0
        %v138 = vsub.s32 0, %v135
        %v139 = vsel %vm137, %v138, %v135
        %v140 = vshrl.u32 %v139, 4
        %v141 = vand.u32 %v139, 15
        %v142 = vsub.s32 0, %v141
        %v143 = vsel %vm137, %v142, %v141
        %vm144 = vcmp.lt.s32.totalorder %v136, 0
        %v145 = vsub.s32 0, %v136
        %v146 = vsel %vm144, %v145, %v136
        %v147 = vshrl.u32 %v146, 4
        %v148 = vand.u32 %v146, 15
        %v149 = vsub.s32 0, %v148
        %v150 = vsel %vm144, %v149, %v148
        %vm151 = vcmp.ne.s32.totalorder %v143, 0
        %vm152 = vcmp.ne.s32.totalorder %v150, 0
        %vm153 = vcmp.lt.s32.totalorder %v143, 0
        %vm154 = vcmp.lt.s32.totalorder %v150, 0
        %vm155 = vmand %vm153, %vm151
        %vm156 = vmand %vm154, %vm152
        %v157 = vadd.s32 %v143, 16
        %v158 = vadd.s32 %v150, 16
        %v159 = vsel %vm155, %v157, %v143
        %v160 = vsel %vm156, %v158, %v150
        %vm161 = vcmp.eq.s32.totalorder %v159, 0
        %vm162 = vcmp.eq.s32.totalorder %v160, 0
        %v164 = vcombine.high %v133, %v133
        %166 = vrot.lane.b32.xlu0 %v133, 1
        %v167 = vpop.permute.xlu0 %166
        %168 = vrot.lane.b32.xlu0 %v164, 1
        %v169 = vpop.permute.xlu0 %168
        %vm170 = vcmp.lt.s32.totalorder %v135, 1
        %v171 = vsel %vm170, %v167, %v169
        %v172 = vsel %vm170, %v169, %v167
        %v173 = vsel %vm161, %v133, %v172
        %v174 = vsel %vm162, %v164, %v171
        %vm175 = vcmp.eq.s32.totalorder %v159, 15
        %vm176 = vcmp.eq.s32.totalorder %v160, 15
        %177 = vrot.lane.b32.xlu0 %v133, 127
        %v178 = vpop.permute.xlu0 %177
        %179 = vrot.lane.b32.xlu0 %v164, 127
        %v180 = vpop.permute.xlu0 %179
        %vm181 = vcmp.lt.s32.totalorder %v135, 127
        %v182 = vsel %vm181, %v178, %v180
        %v183 = vsel %vm181, %v180, %v178
        %v184 = vsel %vm175, %v133, %v182
        %v185 = vsel %vm176, %v164, %v183
        %v186 = vmul.f32 %v133, 2.0
        %v188 = vcombine.high %v186, %v186
        %v190 = vadd.f32 %v173, %v186
        %v191 = vadd.f32 %v174, %v188
        %v192 = vadd.f32 %v190, %v184
        %v193 = vadd.f32 %v191, %v185
        %vm194 = vcmp.lt.s32.totalorder %v135, 16
        %vm195 = vcmp.lt.s32.totalorder %v136, 16
        %196 = vrot.lane.b32.xlu0 %v192, 16
        %v197 = vpop.permute.xlu0 %196
        %198 = vrot.lane.b32.xlu0 %v193, 16
        %v199 = vpop.permute.xlu0 %198
        %v200 = vsel %vm194, %v197, %v199
        %v201 = vsel %vm194, %v199, %v197
        %v202 = vsel %vm194, %v192, %v201
        %v203 = vsel %vm195, %v193, %v200
        %vm204 = vcmp.ge.s32.totalorder %v135, 240
        %vm205 = vcmp.ge.s32.totalorder %v136, 240
        %206 = vrot.lane.b32.xlu0 %v192, 112
        %v207 = vpop.permute.xlu0 %206
        %208 = vrot.lane.b32.xlu0 %v193, 112
        %v209 = vpop.permute.xlu0 %208
        %vm210 = vcmp.lt.s32.totalorder %v135, 112
        %v211 = vsel %vm210, %v207, %v209
        %v212 = vsel %vm210, %v209, %v207
        %v213 = vsel %vm204, %v192, %v211
        %v214 = vsel %vm205, %v193, %v212
        %v215 = vmul.f32 %v192, 2.0
        %v216 = vmul.f32 %v193, 2.0
        %v217 = vadd.f32 %v202, %v215
        %v218 = vadd.f32 %v203, %v216
        %v219 = vadd.f32 %v217, %v213
        %v220 = vadd.f32 %v218, %v214
        %v221 = vmul.f32 %v219, 0.0625
        %v222 = vmul.f32 %v220, 0.0625
        %v225 = vcombine.low %v221, %v222
        %227 = vst [vmem:[%s132] sm:$0xff] %v225
        %s228 = sand.u32 %s52, 1
        %s229 = scalar_lea.sflag [#allocation4], %s228
        %s230 = sand.u32 %s52, 1
        %s231 = smul.addr %s230, 8
        %s232 = scalar_lea.vmem [#allocation5], %s231
        // Predicated region
        $region29: #{tpu_custom_call.1} parent=23 // pred_check
          %p233 = pneg %p62
        $region30: #{tpu_custom_call.1} parent=23 // pred_check_branch
          %235 = sbr.rel (%p233) target = $region32
        $region31: #{tpu_custom_call.1} parent=23 // pred_region
          %s237 = ssub.s32 128, 128
          %238 = vsyncadd %s229, %s237
          %s239 = smul.addr %s18, 2
          %s240 = smul.addr %s239, 64
          %s241 = scalar_lea.hbm %s1, %s240
          %s243 = sshll.u32 %s232, 4
          %s244 = int_to_ptr.vmem [resolvable:$true] %s243
          %246 = dma.vmem_to_hbm [thread:$0]  %s244, 128, %s241, %s229
        $region32: #{tpu_custom_call.1} parent=23 // pred_fallthru
          _
      $region24: #{tpu_custom_call.1} parent=5 // pred_fallthru
        _
      %p247 = scmp.le.s32.totalorder 2, %s13
      // Predicated region
      $region33: #{tpu_custom_call.1} parent=5 // pred_check
        %p248 = pneg %p247
      $region34: #{tpu_custom_call.1} parent=5 // pred_check_branch
        %250 = sbr.rel (%p248) target = $region36
      $region35: #{tpu_custom_call.1} parent=5 // pred_region
        %s251 = ssub.s32 %s13, 2
        // Predicated region
        $region37: #{tpu_custom_call.1} parent=35 // pred_check
          %p252 = pneg %p68
        $region38: #{tpu_custom_call.1} parent=35 // pred_check_branch
          %254 = sbr.rel (%p252) target = $region40
        $region39: #{tpu_custom_call.1} parent=35 // pred_region
          %s255 = sand.u32 %s53, 1
          %s256 = scalar_lea.sflag [#allocation4], %s255
          %s257 = sand.u32 %s53, 1
          %s258 = smul.addr %s257, 8
          %s259 = scalar_lea.vmem [#allocation5], %s258
          %260 = dma.done %s256, 128
        $region40: #{tpu_custom_call.1} parent=35 // pred_fallthru
          _
      $region36: #{tpu_custom_call.1} parent=5 // pred_fallthru
        _
    $region6: #{tpu_custom_call.1} parent=1 // loop_footer
      %s17 = sadd.s32 1, %s13
    $region7: #{tpu_custom_call.1} parent=1 // loop_footer_branch
      %12 = sbr.rel target = $region3
    $region8: #{tpu_custom_call.1} parent=1 // loop_exit
      _
    %261 = vsyncpa [#allocation3], 1
    %s262 = scalar_lea.sflag [#allocation3], 1
    %263 = vsyncpa %s262, 1
    %264 = vsyncpa [#allocation4], 1
    %s265 = scalar_lea.sflag [#allocation4], 1
    %266 = vsyncpa %s265, 1

</llo_original>
